<compile_context>
chip_gen: v6e
topology: v6e:2x2x1
jax: 0.10.0
libtpu: 0.0.40
codegen_flags: <defaults>
</compile_context>

<pallas_src>
import functools

import numpy as np
import jax
import jax.numpy as jnp
from jax.experimental import pallas as pl
from jax.experimental.pallas import tpu as pltpu

DEPTH = 5                      # module default depth
GAMMA = 0.1                    # smoothstep width (module default)
BN_EPS = 1e-5                  # torch BatchNorm1d default eps
N_PAD = 128                    # lane-aligned padding for the leaf axis
TILE_B_MAX = 1024              # batch tile upper bound (few MiB of VMEM temporaries)
MIN_SPLIT_BATCH = 512          # above this, keep >=2 grid steps (v7x megacore)


def _round_up(a, m):
    return ((a + m - 1) // m) * m


# ---------------------------------------------------------------------------
# Kernel
# ---------------------------------------------------------------------------
def _ndt_kernel(x_ref, w_ref, b_ref, d_ref, c_ref, p_ref, out_ref, *,
                depth, gamma, n_pad):
    # decision_layer (Linear) with folded eval-mode BatchNorm.
    # bf16 (fast path) or f32 inputs, f32 MXU accumulation.
    z = jnp.dot(x_ref[...], w_ref[...],
                preferred_element_type=jnp.float32)                 # [TB, L]
    z = z + b_ref[...]

    # _smoothstep (VPU, f32).
    s = (-2.0 / gamma ** 3) * z * z * z + (3.0 / (2.0 * gamma)) * z + 0.5
    s = jnp.where(z <= -gamma / 2.0, 0.0, s)
    s = jnp.where(z >= gamma / 2.0, 1.0, s)                         # [TB, L]

    # Fused soft routing: one matmul over ALL tree levels against the +-1
    # selection matrix (bf16 on the fast path -> single MXU pass; exactly one
    # nonzero per column, so no accumulation error), then a VPU product over
    # the 128-lane-aligned per-level chunks.  Lanes >= n_leaves of each chunk
    # are 0 and never contribute (probs padding is also 0).
    g = jnp.dot(s.astype(d_ref.dtype), d_ref[...],
                preferred_element_type=jnp.float32) + c_ref[...]    # [TB, depth*n_pad]
    mu = g[:, :n_pad]
    for lvl in range(1, depth):
        mu = mu * g[:, lvl * n_pad:(lvl + 1) * n_pad]               # [TB, n_pad]

    # Leaf mixture, emitted lane-dense along the batch axis:
    #   res[o, j] = sum_leaf probs[o, leaf] * mu[j, leaf]
    # (QK^T-style contraction of the last dims -> [n_out, TB]).
    res = jax.lax.dot_general(p_ref[...], mu, (((1,), (1,)), ((), ())),
                              preferred_element_type=jnp.float32)   # [n_out, TB]
    out_ref[...] = res.reshape(out_ref.shape)                       # [1, n_out, TB]


# ---------------------------------------------------------------------------
# Routing tables (fused across levels, 128-lane aligned per level, cached)
# ---------------------------------------------------------------------------
@functools.lru_cache(maxsize=None)
def _routing_tables_np(depth, n_pad):
    """D[node, lvl*n_pad + leaf] = +1 / -1 selecting s / (1-s); c adds the 1."""
    n_leaves = 2 ** depth
    D = np.zeros((n_leaves, depth * n_pad), dtype=np.float32)
    c = np.zeros((1, depth * n_pad), dtype=np.float32)
    for lvl in range(depth):
        for leaf in range(n_leaves):
            prefix = leaf >> (depth - lvl)
            node = (1 << lvl) + prefix          # torch uses decision units 1..2^depth-1
            bit = (leaf >> (depth - 1 - lvl)) & 1
            col = lvl * n_pad + leaf
            if bit == 0:
                D[node, col] = 1.0
            else:
                D[node, col] = -1.0
                c[0, col] = 1.0
    return D, c


# ---------------------------------------------------------------------------
# Wrapper (jitted; all host-side prep becomes traced constants)
# ---------------------------------------------------------------------------
@functools.partial(jax.jit,
                   static_argnames=("depth", "gamma", "use_bf16", "tile_b"))
def neural_decision_tree_forward(x, w, b, bn_w, bn_b, bn_m, bn_v, pi, *,
                                 depth=DEPTH, gamma=GAMMA,
                                 use_bf16=True, tile_b=None):
    """x: [B, F]; w: [F, 2**depth] (pre-transposed); b/bn_*: [1, 2**depth];
    pi: [2**depth, n_out].  use_bf16=False gives the f32 module-faithful path."""
    batch, n_features = x.shape
    n_leaves = 2 ** depth
    n_out = pi.shape[1]
    n_pad = _round_up(n_leaves, N_PAD)

    # Fold eval-mode BatchNorm (+ Linear bias) into the linear weights.
    scale = bn_w.astype(jnp.float32) * jax.lax.rsqrt(bn_v.astype(jnp.float32) + BN_EPS)
    w_fold = w.astype(jnp.float32) * scale                               # [F, L]
    b_fold = ((b.astype(jnp.float32) - bn_m) * scale + bn_b).astype(jnp.float32)

    mxu_dtype = jnp.bfloat16 if use_bf16 else jnp.float32
    x_in = x.astype(mxu_dtype)
    w_in = w_fold.astype(mxu_dtype)

    # Routing tables: +-1 / 0 entries are exact in bf16; offsets stay f32.
    d_np, c_np = _routing_tables_np(depth, n_pad)
    d_cat = jnp.asarray(d_np, mxu_dtype)
    c_cat = jnp.asarray(c_np, jnp.float32)

    # sigmoid(pi) once; transpose to [n_out, n_pad] (lane-dense leaf axis),
    # zero-padded beyond n_leaves.
    probs = jax.nn.sigmoid(pi.astype(jnp.float32)).T                    # [n_out, L]
    p_arg = jnp.zeros((n_out, n_pad), jnp.float32).at[:, :n_leaves].set(probs)

    # Batch tiling.  Round tiles to 16 (bf16 sublane packing); for large
    # batches keep >= 2 grid steps so the "parallel" axis can use both
    # TensorCores on multi-core parts (v7x); extra step overhead is ~0.35us.
    if tile_b is None:
        if batch > MIN_SPLIT_BATCH:
            tile_b = min(TILE_B_MAX, _round_up(-(-batch // 2), 16))
        else:
            tile_b = min(TILE_B_MAX, max(16, _round_up(batch, 16)))
    tile_b = max(16, _round_up(int(tile_b), 16))
    padded = _round_up(batch, tile_b)
    if padded != batch:
        x_in = jnp.pad(x_in, ((0, padded - batch), (0, 0)))
    num_tiles = padded // tile_b

    kernel = functools.partial(_ndt_kernel, depth=depth, gamma=float(gamma),
                               n_pad=n_pad)

    out = pl.pallas_call(
        kernel,
        out_shape=jax.ShapeDtypeStruct((num_tiles, n_out, tile_b), jnp.float32),
        grid=(num_tiles,),
        in_specs=[
            pl.BlockSpec((tile_b, n_features), lambda i: (i, 0)),   # X: batch-tiled
            pl.BlockSpec(w_in.shape, lambda i: (0, 0)),             # params: resident
            pl.BlockSpec(b_fold.shape, lambda i: (0, 0)),
            pl.BlockSpec(d_cat.shape, lambda i: (0, 0)),
            pl.BlockSpec(c_cat.shape, lambda i: (0, 0)),
            pl.BlockSpec(p_arg.shape, lambda i: (0, 0)),
        ],
        # Lane-dense output: batch on the 128-lane axis of each block.
        out_specs=pl.BlockSpec((1, n_out, tile_b), lambda i: (i, 0, 0)),
        compiler_params=pltpu.CompilerParams(
            dimension_semantics=("parallel",)),
    )(x_in, w_in, b_fold, d_cat, c_cat, p_arg)

    # (num_tiles, n_out, tile_b) -> (padded, n_out) -> (batch, n_out)
    out = jnp.transpose(out, (0, 2, 1)).reshape(padded, n_out)
    return out[:batch]


# ---------------------------------------------------------------------------
# Pure-JAX references (mirror of the PyTorch forward)
# ---------------------------------------------------------------------------
def _smoothstep_ref(z, gamma):
    s = (-2.0 / gamma ** 3) * z ** 3 + (3.0 / (2.0 * gamma)) * z + 0.5
    s = jnp.where(z <= -gamma / 2.0, 0.0, s)
    s = jnp.where(z >= gamma / 2.0, 1.0, s)
    return s


def _route_ref(s, depth):
    decisions = jnp.stack([s, 1.0 - s], axis=2)
    B = s.shape[0]
    mu = jnp.ones((B, 1, 1), jnp.float32)
    begin, end = 1, 2
    for lvl in range(depth):
        mu = mu.reshape(B, -1, 1)
        mu = jnp.tile(mu, (1, 1, 2))
        mu = mu * decisions[:, begin:end, :]
        begin = end
        end = begin + 2 ** (lvl + 1)
    return mu.reshape(B, 2 ** depth)


def reference_forward(x, w, b, bn_w, bn_b, bn_m, bn_v, pi, depth, gamma):
    """Module-faithful f32 reference (eval-mode BN)."""
    z = jnp.dot(x, w, precision=jax.lax.Precision.HIGHEST) + b
    z = (z - bn_m) / jnp.sqrt(bn_v + BN_EPS) * bn_w + bn_b
    s = _smoothstep_ref(z, gamma)
    mu = _route_ref(s, depth)
    return jnp.dot(mu, jax.nn.sigmoid(pi), precision=jax.lax.Precision.HIGHEST)


def reference_forward_matched(x, w, b, bn_w, bn_b, bn_m, bn_v, pi, depth, gamma,
                              use_bf16=True):
    """Same math with the kernel's host-side folding / bf16 casts applied."""
    scale = bn_w * jax.lax.rsqrt(bn_v + BN_EPS)
    w_f = w * scale
    b_f = (b - bn_m) * scale + bn_b
    if use_bf16:
        x = x.astype(jnp.bfloat16).astype(jnp.float32)
        w_f = w_f.astype(jnp.bfloat16).astype(jnp.float32)
    z = jnp.dot(x, w_f, precision=jax.lax.Precision.HIGHEST) + b_f
    s = _smoothstep_ref(z, gamma)
    if use_bf16:
        s = s.astype(jnp.bfloat16).astype(jnp.float32)   # routing-matmul input cast
    mu = _route_ref(s, depth)
    return jnp.dot(mu, jax.nn.sigmoid(pi), precision=jax.lax.Precision.HIGHEST)


# ---------------------------------------------------------------------------
if __name__ == "__main__":
    depth = DEPTH
    n_leaves = 2 ** depth
    batch, n_features = 8, 16                 # n_classes = 2 => pi: [n_leaves, 1]

    key = jax.random.PRNGKey(0)
    keys = jax.random.split(key, 8)
    x = jax.random.normal(keys[0], (batch, n_features), jnp.float32)
    w = jax.random.normal(keys[1], (n_features, n_leaves), jnp.float32) / jnp.sqrt(
        jnp.float32(n_features))
    b = jax.random.normal(keys[2], (1, n_leaves), jnp.float32) * 0.1
    bn_w = jax.random.uniform(keys[3], (1, n_leaves), jnp.float32, minval=0.5, maxval=1.5)
    bn_b = jax.random.normal(keys[4], (1, n_leaves), jnp.float32) * 0.1
    bn_m = jax.random.normal(keys[5], (1, n_leaves), jnp.float32) * 0.1
    bn_v = jax.random.uniform(keys[6], (1, n_leaves), jnp.float32, minval=0.5, maxval=1.5)
    pi = jax.random.uniform(keys[7], (n_leaves, 1), jnp.float32)

    # 1) Default fast path (bf16 X/W and bf16 routing) vs precision-matched ref.
    out_bf = jax.block_until_ready(
        neural_decision_tree_forward(x, w, b, bn_w, bn_b, bn_m, bn_v, pi))
    ref_bf = reference_forward_matched(x, w, b, bn_w, bn_b, bn_m, bn_v, pi,
                                       depth, GAMMA, use_bf16=True)
    assert out_bf.shape == (batch, 1)
    assert jnp.allclose(out_bf, ref_bf, atol=1e-2, rtol=1e-2), (out_bf, ref_bf)

    # 2) Full-f32 path vs the module-faithful reference.
    out_f32 = jax.block_until_ready(
        neural_decision_tree_forward(x, w, b, bn_w, bn_b, bn_m, bn_v, pi,
                                     use_bf16=False))
    ref_f32 = reference_forward(x, w, b, bn_w, bn_b, bn_m, bn_v, pi, depth, GAMMA)
    assert jnp.allclose(out_f32, ref_f32, atol=1e-4, rtol=1e-4), (out_f32, ref_f32)

    # 3) Multi-tile grid + tail padding (batch not a multiple of tile_b).
    batch2 = 40
    x2 = jax.random.normal(jax.random.PRNGKey(1), (batch2, n_features), jnp.float32)
    out2 = jax.block_until_ready(
        neural_decision_tree_forward(x2, w, b, bn_w, bn_b, bn_m, bn_v, pi, tile_b=16))
    ref2 = reference_forward_matched(x2, w, b, bn_w, bn_b, bn_m, bn_v, pi,
                                     depth, GAMMA, use_bf16=True)
    assert out2.shape == (batch2, 1)
    assert jnp.allclose(out2, ref2, atol=1e-2, rtol=1e-2), (out2, ref2)

    # 4) Multi-class head (n_classes > 2 => pi: [n_leaves, n_classes]), f32 path.
    pi4 = jax.random.uniform(jax.random.PRNGKey(2), (n_leaves, 4), jnp.float32)
    out4 = jax.block_until_ready(
        neural_decision_tree_forward(x, w, b, bn_w, bn_b, bn_m, bn_v, pi4,
                                     use_bf16=False))
    ref4 = reference_forward(x, w, b, bn_w, bn_b, bn_m, bn_v, pi4, depth, GAMMA)
    assert out4.shape == (batch, 4)
    assert jnp.allclose(out4, ref4, atol=1e-4, rtol=1e-4), (out4, ref4)

    print("KERNEL_OK")
</pallas_src>

<mosaic_0001>
module attributes {stable_mosaic.version = 11 : i64} {
  func.func @_ndt_kernel(%arg0: i32, %arg1: memref<16x16xbf16, #tpu.memory_space<vmem>>, %arg2: memref<16x32xbf16, #tpu.memory_space<vmem>>, %arg3: memref<1x32xf32, #tpu.memory_space<vmem>>, %arg4: memref<32x640xbf16, #tpu.memory_space<vmem>>, %arg5: memref<1x640xf32, #tpu.memory_space<vmem>>, %arg6: memref<1x128xf32, #tpu.memory_space<vmem>>, %arg7: memref<1x1x16xf32, #tpu.memory_space<vmem>>) attributes {dimension_semantics = [#tpu.dimension_semantics<parallel>], iteration_bounds = array<i64: 1>, scalar_prefetch = 0 : i64, scratch_operands = 0 : i64, tpu.core_type = #tpu.core_type<tc>, window_params = [{transform_indices = @transform_0, window_bounds = array<i64: 16, 16>}, {pipeline_mode = #tpu.pipeline_mode<synchronous>, transform_indices = @transform_1, window_bounds = array<i64: 16, 32>}, {pipeline_mode = #tpu.pipeline_mode<synchronous>, transform_indices = @transform_2, window_bounds = array<i64: 1, 32>}, {pipeline_mode = #tpu.pipeline_mode<synchronous>, transform_indices = @transform_3, window_bounds = array<i64: 32, 640>}, {pipeline_mode = #tpu.pipeline_mode<synchronous>, transform_indices = @transform_4, window_bounds = array<i64: 1, 640>}, {pipeline_mode = #tpu.pipeline_mode<synchronous>, transform_indices = @transform_5, window_bounds = array<i64: 1, 128>}, {transform_indices = @transform_6, window_bounds = array<i64: 1, 1, 16>}]} {
    %c0 = arith.constant 0 : index
    %c0_0 = arith.constant 0 : index
    %0 = vector.load %arg1[%c0, %c0_0] : memref<16x16xbf16, #tpu.memory_space<vmem>>, vector<16x16xbf16>
    %c0_1 = arith.constant 0 : index
    %c0_2 = arith.constant 0 : index
    %1 = vector.load %arg2[%c0_1, %c0_2] : memref<16x32xbf16, #tpu.memory_space<vmem>>, vector<16x32xbf16>
    %cst = arith.constant dense<0.000000e+00> : vector<16x32xf32>
    %2 = tpu.matmul %0, %1, %cst {dimension_numbers = #tpu.dot_dimension_numbers<[1], [0], [0], [1], [0, 0, 1, 1], [], []>} : vector<16x16xbf16>, vector<16x32xbf16>, vector<16x32xf32> -> vector<16x32xf32>
    %c0_3 = arith.constant 0 : index
    %c0_4 = arith.constant 0 : index
    %3 = vector.load %arg3[%c0_3, %c0_4] : memref<1x32xf32, #tpu.memory_space<vmem>>, vector<1x32xf32>
    %4 = vector.broadcast %3 : vector<1x32xf32> to vector<16x32xf32>
    %5 = arith.addf %2, %4 : vector<16x32xf32>
    %cst_5 = arith.constant -2.000000e+03 : f32
    %6 = vector.broadcast %cst_5 : f32 to vector<16x32xf32>
    %7 = arith.mulf %6, %5 : vector<16x32xf32>
    %8 = arith.mulf %7, %5 : vector<16x32xf32>
    %9 = arith.mulf %8, %5 : vector<16x32xf32>
    %cst_6 = arith.constant 1.500000e+01 : f32
    %10 = vector.broadcast %cst_6 : f32 to vector<16x32xf32>
    %11 = arith.mulf %10, %5 : vector<16x32xf32>
    %12 = arith.addf %9, %11 : vector<16x32xf32>
    %cst_7 = arith.constant 5.000000e-01 : f32
    %13 = vector.broadcast %cst_7 : f32 to vector<16x32xf32>
    %14 = arith.addf %12, %13 : vector<16x32xf32>
    %cst_8 = arith.constant -5.000000e-02 : f32
    %15 = vector.broadcast %cst_8 : f32 to vector<16x32xf32>
    %16 = arith.cmpf ole, %5, %15 : vector<16x32xf32>
    %cst_9 = arith.constant 0.000000e+00 : f32
    %17 = vector.broadcast %cst_9 : f32 to vector<16x32xf32>
    %18 = arith.select %16, %17, %14 : vector<16x32xi1>, vector<16x32xf32>
    %cst_10 = arith.constant 5.000000e-02 : f32
    %19 = vector.broadcast %cst_10 : f32 to vector<16x32xf32>
    %20 = arith.cmpf oge, %5, %19 : vector<16x32xf32>
    %cst_11 = arith.constant 1.000000e+00 : f32
    %21 = vector.broadcast %cst_11 : f32 to vector<16x32xf32>
    %22 = arith.select %20, %21, %18 : vector<16x32xi1>, vector<16x32xf32>
    %23 = arith.truncf %22 : vector<16x32xf32> to vector<16x32xbf16>
    %c0_12 = arith.constant 0 : index
    %c0_13 = arith.constant 0 : index
    %24 = vector.load %arg4[%c0_12, %c0_13] : memref<32x640xbf16, #tpu.memory_space<vmem>>, vector<32x640xbf16>
    %cst_14 = arith.constant dense<0.000000e+00> : vector<16x640xf32>
    %25 = tpu.matmul %23, %24, %cst_14 {dimension_numbers = #tpu.dot_dimension_numbers<[1], [0], [0], [1], [0, 0, 1, 1], [], []>} : vector<16x32xbf16>, vector<32x640xbf16>, vector<16x640xf32> -> vector<16x640xf32>
    %c0_15 = arith.constant 0 : index
    %c0_16 = arith.constant 0 : index
    %26 = vector.load %arg5[%c0_15, %c0_16] : memref<1x640xf32, #tpu.memory_space<vmem>>, vector<1x640xf32>
    %27 = vector.broadcast %26 : vector<1x640xf32> to vector<16x640xf32>
    %28 = arith.addf %25, %27 : vector<16x640xf32>
    %29 = vector.extract_strided_slice %28 {offsets = [0, 0], sizes = [16, 128], strides = [1, 1]} : vector<16x640xf32> to vector<16x128xf32>
    %30 = vector.extract_strided_slice %28 {offsets = [0, 128], sizes = [16, 128], strides = [1, 1]} : vector<16x640xf32> to vector<16x128xf32>
    %31 = arith.mulf %29, %30 : vector<16x128xf32>
    %32 = vector.extract_strided_slice %28 {offsets = [0, 256], sizes = [16, 128], strides = [1, 1]} : vector<16x640xf32> to vector<16x128xf32>
    %33 = arith.mulf %31, %32 : vector<16x128xf32>
    %34 = vector.extract_strided_slice %28 {offsets = [0, 384], sizes = [16, 128], strides = [1, 1]} : vector<16x640xf32> to vector<16x128xf32>
    %35 = arith.mulf %33, %34 : vector<16x128xf32>
    %36 = vector.extract_strided_slice %28 {offsets = [0, 512], sizes = [16, 128], strides = [1, 1]} : vector<16x640xf32> to vector<16x128xf32>
    %37 = arith.mulf %35, %36 : vector<16x128xf32>
    %c0_17 = arith.constant 0 : index
    %c0_18 = arith.constant 0 : index
    %38 = vector.load %arg6[%c0_17, %c0_18] : memref<1x128xf32, #tpu.memory_space<vmem>>, vector<1x128xf32>
    %cst_19 = arith.constant dense<0.000000e+00> : vector<1x16xf32>
    %39 = tpu.matmul %38, %37, %cst_19 {dimension_numbers = #tpu.dot_dimension_numbers<[1], [1], [0], [0], [0, 0, 1, 0], [], []>} : vector<1x128xf32>, vector<16x128xf32>, vector<1x16xf32> -> vector<1x16xf32>
    %40 = vector.shape_cast %39 : vector<1x16xf32> to vector<1x1x16xf32>
    %c0_20 = arith.constant 0 : index
    %c0_21 = arith.constant 0 : index
    %c0_22 = arith.constant 0 : index
    %41 = vector.load %arg7[%c0_20, %c0_21, %c0_22] : memref<1x1x16xf32, #tpu.memory_space<vmem>>, vector<1x1x16xf32>
    tpu.vector_store %arg7[%c0_20, %c0_21, %c0_22], %40 {strides = array<i32>} : memref<1x1x16xf32, #tpu.memory_space<vmem>>, vector<1x1x16xf32>,
    return
  }
  func.func @transform_0(%arg0: i32) -> (i32, i32) {
    %c0_i32 = arith.constant 0 : i32
    %c0_i32_0 = arith.constant 0 : i32
    return %arg0, %c0_i32 : i32, i32
  }
  func.func @transform_1(%arg0: i32) -> (i32, i32) {
    %c0_i32 = arith.constant 0 : i32
    %c0_i32_0 = arith.constant 0 : i32
    %c0_i32_1 = arith.constant 0 : i32
    return %c0_i32, %c0_i32_0 : i32, i32
  }
  func.func @transform_2(%arg0: i32) -> (i32, i32) {
    %c0_i32 = arith.constant 0 : i32
    %c0_i32_0 = arith.constant 0 : i32
    %c0_i32_1 = arith.constant 0 : i32
    return %c0_i32, %c0_i32_0 : i32, i32
  }
  func.func @transform_3(%arg0: i32) -> (i32, i32) {
    %c0_i32 = arith.constant 0 : i32
    %c0_i32_0 = arith.constant 0 : i32
    %c0_i32_1 = arith.constant 0 : i32
    return %c0_i32, %c0_i32_0 : i32, i32
  }
  func.func @transform_4(%arg0: i32) -> (i32, i32) {
    %c0_i32 = arith.constant 0 : i32
    %c0_i32_0 = arith.constant 0 : i32
    %c0_i32_1 = arith.constant 0 : i32
    return %c0_i32, %c0_i32_0 : i32, i32
  }
  func.func @transform_5(%arg0: i32) -> (i32, i32) {
    %c0_i32 = arith.constant 0 : i32
    %c0_i32_0 = arith.constant 0 : i32
    %c0_i32_1 = arith.constant 0 : i32
    return %c0_i32, %c0_i32_0 : i32, i32
  }
  func.func @transform_6(%arg0: i32) -> (i32, i32, i32) {
    %c0_i32 = arith.constant 0 : i32
    %c0_i32_0 = arith.constant 0 : i32
    %c0_i32_1 = arith.constant 0 : i32
    return %arg0, %c0_i32, %c0_i32_0 : i32, i32, i32
  }
}

</mosaic_0001>

<llo_original>
// kernel: neural_decision_tree_forward.1
$region0: #{neural_decision_tree_forward.1}
  #allocation0 [shape = 'u32[]', space=smem, size = 0x4, offset = 0x4, fixed_abs, tag = 'smem constant byte address 0x4 - core index']
  #allocation1 [shape = 'u32[144,128]{1,0:T(1,128)}', space=vmem, size = 0x12000, scoped, tag = 'internal scratch']
  %s0 = inlined_call_operand.vmem [shape: bf16[16,16], index: 0, kind: input, shape index: {}]
  %s1 = inlined_call_operand.vmem [shape: bf16[16,32], index: 1, kind: input, shape index: {}]
  %s2 = inlined_call_operand.vmem [shape: f32[1,32], index: 2, kind: input, shape index: {}]
  %s3 = inlined_call_operand.vmem [shape: bf16[32,640], index: 3, kind: input, shape index: {}]
  %s4 = inlined_call_operand.hbm [shape: f32[1,640], index: 4, kind: input, shape index: {}]
  %s5 = inlined_call_operand.vmem [shape: f32[1,128], index: 5, kind: input, shape index: {}]
  %s6 = inlined_call_operand.vmem [shape: f32[1,1,16], index: 6, kind: output, shape index: {}]
  %s7 = sld [smem:[#allocation0]]
  $region38: #{neural_decision_tree_forward.1} parent=0
    _
  %s9 = ssub.s32 1, %s7
  %s10 = scalar_select 0, %s9, %s7
  $region1: #{neural_decision_tree_forward.1} parent=0
    #allocation2 [shape = 'u8[2560]{0}', space=vmem, size = 0xc00, scoped, tag = 'input window, operand 4, single buffered']
    #allocation3 [shape = 's32[1]{0}', space=sflag, size = 0x4, scoped, tag = 'scoped memory for neural_decision_tree_forward.1']
    %11 = vsyncpa [#allocation3], 0
    // Predicated region
    $region2: #{neural_decision_tree_forward.1} parent=1 // pred_check
      _
    $region3: #{neural_decision_tree_forward.1} parent=1 // pred_check_branch
      %13 = sbr.rel (0) target = $region5
    $region4: #{neural_decision_tree_forward.1} parent=1 // pred_region
      _
    $region5: #{neural_decision_tree_forward.1} parent=1 // pred_fallthru
      _
    // Predicated region
    $region6: #{neural_decision_tree_forward.1} parent=1 // pred_check
      _
    $region7: #{neural_decision_tree_forward.1} parent=1 // pred_check_branch
      %15 = sbr.rel (0) target = $region9
    $region8: #{neural_decision_tree_forward.1} parent=1 // pred_region
      _
    $region9: #{neural_decision_tree_forward.1} parent=1 // pred_fallthru
      _
    // Predicated region
    $region10: #{neural_decision_tree_forward.1} parent=1 // pred_check
      _
    $region11: #{neural_decision_tree_forward.1} parent=1 // pred_check_branch
      %17 = sbr.rel (0) target = $region13
    $region12: #{neural_decision_tree_forward.1} parent=1 // pred_region
      _
    $region13: #{neural_decision_tree_forward.1} parent=1 // pred_fallthru
      _
    // Predicated region
    $region14: #{neural_decision_tree_forward.1} parent=1 // pred_check
      _
    $region15: #{neural_decision_tree_forward.1} parent=1 // pred_check_branch
      %19 = sbr.rel (0) target = $region17
    $region16: #{neural_decision_tree_forward.1} parent=1 // pred_region
      _
    $region17: #{neural_decision_tree_forward.1} parent=1 // pred_fallthru
      _
    // Predicated region
    $region18: #{neural_decision_tree_forward.1} parent=1 // pred_check
      _
    $region19: #{neural_decision_tree_forward.1} parent=1 // pred_check_branch
      %21 = sbr.rel (0) target = $region21
    $region20: #{neural_decision_tree_forward.1} parent=1 // pred_region
      %s23 = ssub.s32 80, 80
      %24 = vsyncadd [#allocation3], %s23
      %s26 = sshll.u32 [#allocation2], 4
      %s27 = int_to_ptr.vmem [resolvable:$true] %s26
      %29 = dma.hbm_to_vmem [thread:$0]  %s4, 80, %s27, [#allocation3]
    $region21: #{neural_decision_tree_forward.1} parent=1 // pred_fallthru
      _
    // Predicated region
    $region22: #{neural_decision_tree_forward.1} parent=1 // pred_check
      _
    $region23: #{neural_decision_tree_forward.1} parent=1 // pred_check_branch
      %31 = sbr.rel (0) target = $region25
    $region24: #{neural_decision_tree_forward.1} parent=1 // pred_region
      _
    $region25: #{neural_decision_tree_forward.1} parent=1 // pred_fallthru
      _
    // Predicated region
    $region26: #{neural_decision_tree_forward.1} parent=1 // pred_check
      _
    $region27: #{neural_decision_tree_forward.1} parent=1 // pred_check_branch
      %33 = sbr.rel (0) target = $region29
    $region28: #{neural_decision_tree_forward.1} parent=1 // pred_region
      %34 = dma.done [#allocation3], 80
    $region29: #{neural_decision_tree_forward.1} parent=1 // pred_fallthru
      _
    %v36 = vld [vmem:[%s0] sm:$0xf]
    %v37 = vld [vmem:[%s0 + $0x4] sm:$0xf]
    %v38 = vld [vmem:[%s1] sm:$0xf]
    %v39 = vld [vmem:[%s1 + $0x4] sm:$0xf]
    %v40 = vld [vmem:[%s2] sm:$0x1]
    %v42 = vlaneseq
    %v43 = vshrl.u32 %v42, 7
    %v44 = vsub.s32 0, %v43
    %v45 = vrot.slane %v40, %v44
    %v49 = vunpack.c.l.b16 %v36
    %v50 = vunpack.c.l.b16 %v37
    %v51 = vpack.c.b16 %v50, %v49
    %v54 = vunpack.c.l.b16 %v38
    %v55 = vunpack.c.l.b16 %v39
    %v56 = vpack.c.b16 %v55, %v54
    %vm58 = vcmask 130048
    %v60 = vsel %vm58, %v51, 0
    %62 = vmatprep.subr.bf16.mxu0 0
    %63 = vmatpush1.bf16.msra.mxu0 0
    %64 = vmatprep.subr.bf16.mxu0 0
    %65 = vmatpush1.bf16.msra.mxu0 0
    %66 = vmatprep.subr.bf16.mxu0 0
    %67 = vmatpush1.bf16.msra.mxu0 0
    %68 = vmatprep.subr.bf16.mxu0 0
    %69 = vmatpush1.bf16.msra.mxu0 0
    %70 = vmatprep.subr.bf16.mxu0 0
    %71 = vmatpush1.bf16.msra.mxu0 0
    %72 = vmatprep.subr.bf16.mxu0 0
    %73 = vmatpush1.bf16.msra.mxu0 0
    %74 = vmatprep.subr.bf16.mxu0 0
    %75 = vmatpush1.bf16.msra.mxu0 0
    %76 = vmatprep.subr.bf16.mxu0 0
    %77 = vmatpush1.bf16.msra.mxu0 %v56
    %78 = vmatprep.subr.bf16.mxu0 0
    %79 = vmatpush2.bf16.msra.mxu0 0
    %80 = vmatprep.subr.bf16.mxu0 0
    %81 = vmatpush2.bf16.msra.mxu0 0
    %82 = vmatprep.subr.bf16.mxu0 0
    %83 = vmatpush2.bf16.msra.mxu0 0
    %84 = vmatprep.subr.bf16.mxu0 0
    %85 = vmatpush2.bf16.msra.mxu0 0
    %86 = vmatprep.subr.bf16.mxu0 0
    %87 = vmatpush2.bf16.msra.mxu0 0
    %88 = vmatprep.subr.bf16.mxu0 0
    %89 = vmatpush2.bf16.msra.mxu0 0
    %90 = vmatprep.subr.bf16.mxu0 0
    %91 = vmatpush2.bf16.msra.mxu0 0
    %92 = vmatprep.subr.bf16.mxu0 0
    %93 = vmatpush2.bf16.msra.mxu0 0
    %94 = vmatprep.mubr.bf16.mxu0 0
    %95 = vmatmul.mubr.bf16.gmra.mxu0 %v60
    %v96 = vpop.f32.mrf.mxu0
    %v97 = vadd.f32 %v45, %v96
    %v98 = vpop.f32.mrf.mxu0
    %v99 = vpop.f32.mrf.mxu0
    %v100 = vadd.f32 %v45, %v99
    %v101 = vpop.f32.mrf.mxu0
    %102 = vdwg.mxu0
    %v103 = vmul.f32 %v97, -2000.0
    %v104 = vmul.f32 %v100, -2000.0
    %v105 = vmul.f32 %v103, %v97
    %v106 = vmul.f32 %v104, %v100
    %v107 = vmul.f32 %v105, %v97
    %v108 = vmul.f32 %v106, %v100
    %v109 = vmul.f32 %v97, 15.0
    %v110 = vmul.f32 %v100, 15.0
    %v111 = vadd.f32 %v107, %v109
    %v112 = vadd.f32 %v108, %v110
    %v113 = vadd.f32 %v111, 0.5
    %v114 = vadd.f32 %v112, 0.5
    %vm115 = vcmp.le.f32.partialorder %v97, -0.05
    %vm116 = vcmp.le.f32.partialorder %v100, -0.05
    %v117 = vsel %vm115, 0.0, %v113
    %v118 = vsel %vm116, 0.0, %v114
    %vm119 = vcmp.ge.f32.partialorder %v97, 0.05
    %vm120 = vcmp.ge.f32.partialorder %v100, 0.05
    %v121 = vsel %vm119, 1.0, %v117
    %v122 = vsel %vm120, 1.0, %v118
    %v123 = vpack.c.bf16 %v122, %v121
    %v124 = vld [vmem:[%s3] sm:$0xff]
    %v125 = vld [vmem:[%s3 + $0x8] sm:$0xff]
    %v126 = vld [vmem:[%s3 + $0x10] sm:$0xf]
    %v127 = vld [vmem:[%s3 + $0x14] sm:$0xff]
    %v128 = vld [vmem:[%s3 + $0x1c] sm:$0xff]
    %v129 = vld [vmem:[%s3 + $0x24] sm:$0xf]
    %v130 = vld [vmem:[%s3 + $0x28] sm:$0xff]
    %v131 = vld [vmem:[%s3 + $0x30] sm:$0xff]
    %v132 = vld [vmem:[%s3 + $0x38] sm:$0xf]
    %v133 = vld [vmem:[%s3 + $0x3c] sm:$0xff]
    %v134 = vld [vmem:[%s3 + $0x44] sm:$0xff]
    %v135 = vld [vmem:[%s3 + $0x4c] sm:$0xf]
    %v136 = vld [vmem:[#allocation2] sm:$0x1f]
    %v138 = vlaneseq
    %v139 = vshrl.u32 %v138, 7
    %v140 = vsub.s32 0, %v139
    %v141 = vrot.slane %v136, %v140
    %v142 = vlaneseq
    %v143 = vshrl.u32 %v142, 7
    %v144 = vsub.s32 1, %v143
    %v145 = vrot.slane %v136, %v144
    %v146 = vlaneseq
    %v147 = vshrl.u32 %v146, 7
    %v148 = vsub.s32 2, %v147
    %v149 = vrot.slane %v136, %v148
    %v150 = vlaneseq
    %v151 = vshrl.u32 %v150, 7
    %v152 = vsub.s32 3, %v151
    %v153 = vrot.slane %v136, %v152
    %v154 = vlaneseq
    %v155 = vshrl.u32 %v154, 7
    %v156 = vsub.s32 4, %v155
    %v157 = vrot.slane %v136, %v156
    %v175 = vunpack.c.l.b16 %v124
    %v176 = vunpack.c.h.b16 %v124
    %v177 = vunpack.c.l.b16 %v125
    %v178 = vunpack.c.h.b16 %v125
    %v179 = vunpack.c.l.b16 %v126
    %v180 = vunpack.c.l.b16 %v127
    %v181 = vunpack.c.h.b16 %v127
    %v182 = vunpack.c.l.b16 %v128
    %v183 = vunpack.c.h.b16 %v128
    %v184 = vunpack.c.l.b16 %v129
    %v185 = vunpack.c.l.b16 %v130
    %v186 = vunpack.c.h.b16 %v130
    %v187 = vunpack.c.l.b16 %v131
    %v188 = vunpack.c.h.b16 %v131
    %v189 = vunpack.c.l.b16 %v132
    %v190 = vunpack.c.l.b16 %v133
    %v191 = vunpack.c.h.b16 %v133
    %v192 = vunpack.c.l.b16 %v134
    %v193 = vunpack.c.h.b16 %v134
    %v194 = vunpack.c.l.b16 %v135
    %v195 = vpack.c.b16 %v180, %v175
    %v196 = vpack.c.b16 %v181, %v176
    %v197 = vpack.c.b16 %v182, %v177
    %v198 = vpack.c.b16 %v183, %v178
    %v199 = vpack.c.b16 %v184, %v179
    %v200 = vpack.c.b16 %v190, %v185
    %v201 = vpack.c.b16 %v191, %v186
    %v202 = vpack.c.b16 %v192, %v187
    %v203 = vpack.c.b16 %v193, %v188
    %v204 = vpack.c.b16 %v194, %v189
    %vm215 = vcmask 261120
    %v217 = vsel %vm215, %v123, 0
    %219 = vmatprep.subr.bf16.mxu0 0
    %220 = vmatpush1.bf16.msra.mxu0 0
    %221 = vmatprep.subr.bf16.mxu0 0
    %222 = vmatpush1.bf16.msra.mxu0 0
    %223 = vmatprep.subr.bf16.mxu0 0
    %224 = vmatpush1.bf16.msra.mxu0 0
    %225 = vmatprep.subr.bf16.mxu0 0
    %226 = vmatpush1.bf16.msra.mxu0 0
    %227 = vmatprep.subr.bf16.mxu0 0
    %228 = vmatpush1.bf16.msra.mxu0 0
    %229 = vmatprep.subr.bf16.mxu0 0
    %230 = vmatpush1.bf16.msra.mxu0 0
    %231 = vmatprep.subr.bf16.mxu0 %v201
    %232 = vmatpush1.bf16.msra.mxu0 %v200
    %233 = vmatprep.subr.bf16.mxu0 %v196
    %234 = vmatpush1.bf16.msra.mxu0 %v195
    %235 = vmatprep.subr.bf16.mxu0 0
    %236 = vmatpush2.bf16.msra.mxu0 0
    %237 = vmatprep.subr.bf16.mxu0 0
    %238 = vmatpush2.bf16.msra.mxu0 0
    %239 = vmatprep.subr.bf16.mxu0 0
    %240 = vmatpush2.bf16.msra.mxu0 0
    %241 = vmatprep.subr.bf16.mxu0 0
    %242 = vmatpush2.bf16.msra.mxu0 0
    %243 = vmatprep.subr.bf16.mxu0 0
    %244 = vmatpush2.bf16.msra.mxu0 0
    %245 = vmatprep.subr.bf16.mxu0 0
    %246 = vmatpush2.bf16.msra.mxu0 0
    %247 = vmatprep.subr.bf16.mxu0 0
    %248 = vmatpush2.bf16.msra.mxu0 0
    %249 = vmatprep.subr.bf16.mxu0 0
    %250 = vmatpush2.bf16.msra.mxu0 0
    %251 = vmatprep.mubr.bf16.mxu0 0
    %252 = vmatmul.mubr.bf16.gmra.mxu0 %v217
    %v253 = vpop.f32.mrf.mxu0
    %v254 = vadd.f32 %v141, %v253
    %v255 = vpop.f32.mrf.mxu0
    %v256 = vadd.f32 %v145, %v255
    %v257 = vpop.f32.mrf.mxu0
    %v258 = vadd.f32 %v141, %v257
    %v259 = vpop.f32.mrf.mxu0
    %v260 = vadd.f32 %v145, %v259
    %261 = vdwg.mxu0
    %262 = vmatprep.subr.bf16.mxu0 0
    %263 = vmatpush1.bf16.msra.mxu0 0
    %264 = vmatprep.subr.bf16.mxu0 0
    %265 = vmatpush1.bf16.msra.mxu0 0
    %266 = vmatprep.subr.bf16.mxu0 0
    %267 = vmatpush1.bf16.msra.mxu0 0
    %268 = vmatprep.subr.bf16.mxu0 0
    %269 = vmatpush1.bf16.msra.mxu0 0
    %270 = vmatprep.subr.bf16.mxu0 0
    %271 = vmatpush1.bf16.msra.mxu0 0
    %272 = vmatprep.subr.bf16.mxu0 0
    %273 = vmatpush1.bf16.msra.mxu0 0
    %274 = vmatprep.subr.bf16.mxu0 %v203
    %275 = vmatpush1.bf16.msra.mxu0 %v202
    %276 = vmatprep.subr.bf16.mxu0 %v198
    %277 = vmatpush1.bf16.msra.mxu0 %v197
    %278 = vmatprep.subr.bf16.mxu0 0
    %279 = vmatpush2.bf16.msra.mxu0 0
    %280 = vmatprep.subr.bf16.mxu0 0
    %281 = vmatpush2.bf16.msra.mxu0 0
    %282 = vmatprep.subr.bf16.mxu0 0
    %283 = vmatpush2.bf16.msra.mxu0 0
    %284 = vmatprep.subr.bf16.mxu0 0
    %285 = vmatpush2.bf16.msra.mxu0 0
    %286 = vmatprep.subr.bf16.mxu0 0
    %287 = vmatpush2.bf16.msra.mxu0 0
    %288 = vmatprep.subr.bf16.mxu0 0
    %289 = vmatpush2.bf16.msra.mxu0 0
    %290 = vmatprep.subr.bf16.mxu0 0
    %291 = vmatpush2.bf16.msra.mxu0 0
    %292 = vmatprep.subr.bf16.mxu0 0
    %293 = vmatpush2.bf16.msra.mxu0 0
    %294 = vmatprep.mubr.bf16.mxu0 0
    %295 = vmatmul.mubr.bf16.gmra.mxu0 %v217
    %v296 = vpop.f32.mrf.mxu0
    %v297 = vadd.f32 %v149, %v296
    %v298 = vpop.f32.mrf.mxu0
    %v299 = vadd.f32 %v153, %v298
    %v300 = vpop.f32.mrf.mxu0
    %v301 = vadd.f32 %v149, %v300
    %v302 = vpop.f32.mrf.mxu0
    %v303 = vadd.f32 %v153, %v302
    %304 = vdwg.mxu0
    %305 = vmatprep.subr.bf16.mxu0 0
    %306 = vmatpush1.bf16.msra.mxu0 0
    %307 = vmatprep.subr.bf16.mxu0 0
    %308 = vmatpush1.bf16.msra.mxu0 0
    %309 = vmatprep.subr.bf16.mxu0 0
    %310 = vmatpush1.bf16.msra.mxu0 0
    %311 = vmatprep.subr.bf16.mxu0 0
    %312 = vmatpush1.bf16.msra.mxu0 0
    %313 = vmatprep.subr.bf16.mxu0 0
    %314 = vmatpush1.bf16.msra.mxu0 0
    %315 = vmatprep.subr.bf16.mxu0 0
    %316 = vmatpush1.bf16.msra.mxu0 0
    %317 = vmatprep.subr.bf16.mxu0 0
    %318 = vmatpush1.bf16.msra.mxu0 %v204
    %319 = vmatprep.subr.bf16.mxu0 0
    %320 = vmatpush1.bf16.msra.mxu0 %v199
    %321 = vmatprep.subr.bf16.mxu0 0
    %322 = vmatpush2.bf16.msra.mxu0 0
    %323 = vmatprep.subr.bf16.mxu0 0
    %324 = vmatpush2.bf16.msra.mxu0 0
    %325 = vmatprep.subr.bf16.mxu0 0
    %326 = vmatpush2.bf16.msra.mxu0 0
    %327 = vmatprep.subr.bf16.mxu0 0
    %328 = vmatpush2.bf16.msra.mxu0 0
    %329 = vmatprep.subr.bf16.mxu0 0
    %330 = vmatpush2.bf16.msra.mxu0 0
    %331 = vmatprep.subr.bf16.mxu0 0
    %332 = vmatpush2.bf16.msra.mxu0 0
    %333 = vmatprep.subr.bf16.mxu0 0
    %334 = vmatpush2.bf16.msra.mxu0 0
    %335 = vmatprep.subr.bf16.mxu0 0
    %336 = vmatpush2.bf16.msra.mxu0 0
    %337 = vmatprep.mubr.bf16.mxu0 0
    %338 = vmatmul.mubr.bf16.gmra.mxu0 %v217
    %v339 = vpop.f32.mrf.mxu0
    %v340 = vadd.f32 %v157, %v339
    %v341 = vpop.f32.mrf.mxu0
    %v342 = vpop.f32.mrf.mxu0
    %v343 = vadd.f32 %v157, %v342
    %v344 = vpop.f32.mrf.mxu0
    %345 = vdwg.mxu0
    %v346 = vmul.f32 %v254, %v256
    %v347 = vmul.f32 %v258, %v260
    %v348 = vmul.f32 %v346, %v297
    %v349 = vmul.f32 %v347, %v301
    %v350 = vmul.f32 %v348, %v299
    %v351 = vmul.f32 %v349, %v303
    %v352 = vmul.f32 %v350, %v340
    %v353 = vmul.f32 %v351, %v343
    %v354 = vld [vmem:[%s5] sm:$0x1]
    %355 = vmatprep.subr.mxu0 0.0
    %356 = vmatpush1.xpose.msra.mxu0 0.0
    %357 = vmatprep.subr.mxu0 0.0
    %358 = vmatpush1.xpose.msra.mxu0 0.0
    %359 = vmatprep.subr.mxu0 0.0
    %360 = vmatpush1.xpose.msra.mxu0 0.0
    %361 = vmatprep.subr.mxu0 0.0
    %362 = vmatpush1.xpose.msra.mxu0 0.0
    %363 = vmatprep.subr.mxu0 0.0
    %364 = vmatpush1.xpose.msra.mxu0 0.0
    %365 = vmatprep.subr.mxu0 0.0
    %366 = vmatpush1.xpose.msra.mxu0 0.0
    %367 = vmatprep.subr.mxu0 0.0
    %368 = vmatpush1.xpose.msra.mxu0 0.0
    %369 = vmatprep.subr.mxu0 0.0
    %370 = vmatpush1.xpose.msra.mxu0 0.0
    %371 = vmatprep.subr.mxu0 0.0
    %372 = vmatpush1.xpose.msra.mxu0 0.0
    %373 = vmatprep.subr.mxu0 0.0
    %374 = vmatpush1.xpose.msra.mxu0 0.0
    %375 = vmatprep.subr.mxu0 0.0
    %376 = vmatpush1.xpose.msra.mxu0 0.0
    %377 = vmatprep.subr.mxu0 0.0
    %378 = vmatpush1.xpose.msra.mxu0 0.0
    %379 = vmatprep.subr.mxu0 0.0
    %380 = vmatpush1.xpose.msra.mxu0 0.0
    %381 = vmatprep.subr.mxu0 0.0
    %382 = vmatpush1.xpose.msra.mxu0 0.0
    %383 = vmatprep.subr.mxu0 0.0
    %384 = vmatpush1.xpose.msra.mxu0 %v353
    %385 = vmatprep.subr.mxu0 0.0
    %386 = vmatpush1.xpose.msra.mxu0 %v352
    %387 = vmatprep.subr.mxu0 0.0
    %388 = vmatpush2.xpose.msra.mxu0 0.0
    %389 = vmatprep.subr.mxu0 0.0
    %390 = vmatpush2.xpose.msra.mxu0 0.0
    %391 = vmatprep.subr.mxu0 0.0
    %392 = vmatpush2.xpose.msra.mxu0 0.0
    %393 = vmatprep.subr.mxu0 0.0
    %394 = vmatpush2.xpose.msra.mxu0 0.0
    %395 = vmatprep.subr.mxu0 0.0
    %396 = vmatpush2.xpose.msra.mxu0 0.0
    %397 = vmatprep.subr.mxu0 0.0
    %398 = vmatpush2.xpose.msra.mxu0 0.0
    %399 = vmatprep.subr.mxu0 0.0
    %400 = vmatpush2.xpose.msra.mxu0 0.0
    %401 = vmatprep.subr.mxu0 0.0
    %402 = vmatpush2.xpose.msra.mxu0 0.0
    %403 = vmatprep.subr.mxu0 0.0
    %404 = vmatpush2.xpose.msra.mxu0 0.0
    %405 = vmatprep.subr.mxu0 0.0
    %406 = vmatpush2.xpose.msra.mxu0 0.0
    %407 = vmatprep.subr.mxu0 0.0
    %408 = vmatpush2.xpose.msra.mxu0 0.0
    %409 = vmatprep.subr.mxu0 0.0
    %410 = vmatpush2.xpose.msra.mxu0 0.0
    %411 = vmatprep.subr.mxu0 0.0
    %412 = vmatpush2.xpose.msra.mxu0 0.0
    %413 = vmatprep.subr.mxu0 0.0
    %414 = vmatpush2.xpose.msra.mxu0 0.0
    %415 = vmatprep.subr.mxu0 0.0
    %416 = vmatpush2.xpose.msra.mxu0 0.0
    %417 = vmatprep.subr.mxu0 0.0
    %418 = vmatpush2.xpose.msra.mxu0 0.0
    %419 = vmatprep.mubr.f32.mxu0 0.0
    %420 = vmatmul.mubr.f32.gmra.mxu0 %v354
    %v421 = vpop.f32.mrf.mxu0
    %v422 = vadd.f32 0.0, %v421
    %v423 = vpop.f32.mrf.mxu0
    %424 = vdwg.mxu0
    %vm425 = vcmask 122880
    %426 = vst.msk [vmem:[%s6] sm:$0x1] %vm425, %v422
    // Predicated region
    $region30: #{neural_decision_tree_forward.1} parent=1 // pred_check
      _
    $region31: #{neural_decision_tree_forward.1} parent=1 // pred_check_branch
      %428 = sbr.rel (0) target = $region33
    $region32: #{neural_decision_tree_forward.1} parent=1 // pred_region
      _
    $region33: #{neural_decision_tree_forward.1} parent=1 // pred_fallthru
      _
    // Predicated region
    $region34: #{neural_decision_tree_forward.1} parent=1 // pred_check
      _
    $region35: #{neural_decision_tree_forward.1} parent=1 // pred_check_branch
      %430 = sbr.rel (0) target = $region37
    $region36: #{neural_decision_tree_forward.1} parent=1 // pred_region
      _
    $region37: #{neural_decision_tree_forward.1} parent=1 // pred_fallthru
      _
    %431 = vsyncpa [#allocation3], 1

</llo_original>
